<compile_context>
chip_gen: v6e
topology: v6e:2x2x1
jax: 0.10.0
libtpu: 0.0.40
codegen_flags: <defaults>
</compile_context>

<pallas_src>
import jax
import jax.numpy as jnp
from jax.experimental import pallas as pl
from jax.experimental.pallas import tpu as pltpu

_INV_SQRT2 = 0.7071067811865476


def _adapter_kernel(x_ref, wd_ref, bd_ref, wu_ref, buz_ref, scale_ref, o_ref):
    """Fused adapter forward on one (tm, H) sequence tile of one batch element.

    x_ref:   (tm, H)   VMEM  (batch dim squeezed, native dtype)
    wd_ref:  (H, Ap)   VMEM  (down_project.weight^T, A padded to Ap, resident)
    bd_ref:  (1, Ap)   VMEM  f32 (resident)
    wu_ref:  (Ap, H)   VMEM  (up_project.weight^T, resident)
    buz_ref: (1, H)    VMEM  f32 = up bias + latent z for this batch element
    scale_ref: (1,)    SMEM  f32 adapter scalar
    o_ref:   (tm, H)   VMEM
    """
    x = x_ref[...]                                                    # native dtype

    # Down projection on the MXU (native-dtype inputs, f32 accumulation).
    down = jnp.dot(x, wd_ref[...], preferred_element_type=jnp.float32)
    down = down + bd_ref[...]                                         # (1, Ap) broadcast

    # Exact (erf-based) GELU == HF ACT2FN['gelu']; f32 only on the small (tm, Ap) tile.
    act = 0.5 * down * (1.0 + jax.lax.erf(down * _INV_SQRT2))

    # Up projection (feed MXU in the input dtype), f32 accumulation; bias + z fused.
    up = jnp.dot(act.astype(x.dtype), wu_ref[...],
                 preferred_element_type=jnp.float32)
    up = up + buz_ref[...]

    # out = hidden + scale * (Wu·act + bu + z)   (scale applied after adding z, as in torch)
    o_ref[...] = (x.astype(jnp.float32) + scale_ref[0] * up).astype(o_ref.dtype)


def _sublane_multiple(dtype):
    """Sublane packing multiple for the second-minor dim: 8 (f32), 16 (bf16), 32 (8-bit)."""
    return {4: 8, 2: 16, 1: 32}.get(jnp.dtype(dtype).itemsize, 8)


def _vmem_capacity_bytes():
    try:
        return int(pltpu.get_tpu_info().vmem_capacity_bytes)
    except Exception:
        return 64 * 1024 * 1024        # conservative (v7x-sized) fallback


def _choose_seq_tile(S, H, Ap, x_dtype, budget_bytes, *, min_grid_steps=4, max_tile=1024):
    """Largest legal sequence tile that fits the VMEM budget while keeping at least
    `min_grid_steps` grid steps per batch so the x/out DMAs stay pipelined."""
    x_item = jnp.dtype(x_dtype).itemsize
    sub = _sublane_multiple(x_dtype)

    # Per-row pipeline footprint:
    #   x tile + out tile, double-buffered, native dtype:        4 * H * itemsize
    #   f32 temporaries: upcast x, up, result sum:               12 * H
    #   f32 down + act (simultaneously live) + act dtype cast:   ~12 * Ap
    per_row = 4 * H * x_item + 12 * H + 12 * Ap
    fit_cap = budget_bytes // max(per_row, 1)
    pipe_cap = max(sub, S // min_grid_steps)
    cap = min(fit_cap, pipe_cap, max_tile)

    # tm must divide S and be a sublane multiple (or equal the full extent S).
    candidates = sorted({d for d in range(1, S + 1)
                         if S % d == 0 and (d % sub == 0 or d == S)})
    ok = [d for d in candidates if d <= cap]
    if ok:
        return max(ok)

    # No candidate under the combined cap (tiny or awkward S, e.g. prime): take the
    # smallest legal tile, but refuse to silently blow way past the VMEM budget.
    tm = min(candidates)
    if tm * per_row > 2 * max(budget_bytes, 1):
        raise ValueError(
            f"No sequence tile of S={S} fits the VMEM budget; pass seq_tile= "
            f"explicitly or reshape/pad the sequence dimension.")
    return tm


def latent_gpt2_adapter(hidden_states, wd, bd, wu, bu, z_proj, scale, *,
                        seq_tile=None, donate_hidden_states=False):
    """Fused Latent_GPT2Adapter forward.

    hidden_states: [B, S, H], wd: [H, A], bd: [A], wu: [A, H], bu: [H], z_proj: [B, 1, H].

    Production note: pass bf16 `hidden_states` -- this kernel is HBM-bound and the
    streamed x-in/out bytes dominate; f32 activations roughly double wall time.
    Set donate_hidden_states=True when the caller can donate the activation buffer
    (same shape/dtype in and out -> output aliases the input allocation).
    """
    B, S, H = hidden_states.shape
    Hw, A = wd.shape
    assert Hw == H and wu.shape == (A, H) and bd.shape == (A,) and bu.shape == (H,)
    assert z_proj.shape == (B, 1, H)

    # Pad the adapter dim to a multiple of 128 lanes (padded Wu rows are zero, so the
    # math is unchanged). Kept at 128 -- the kernel is HBM-bound, wider MXU columns
    # would only double the (tm, Ap) f32 intermediates and GELU work.
    Ap = max(128, ((A + 127) // 128) * 128)
    if Ap != A:
        wd = jnp.pad(wd, ((0, 0), (0, Ap - A)))
        bd = jnp.pad(bd, (0, Ap - A))
        wu = jnp.pad(wu, ((0, Ap - A), (0, 0)))

    bd2 = bd.reshape(1, Ap).astype(jnp.float32)
    # Pre-combine the up-projection bias with the per-batch latent projection:
    # one (1, H) broadcast add per tile instead of two (trims the elementwise tail).
    buz = bu.astype(jnp.float32)[None, None, :] + z_proj.astype(jnp.float32)   # (B, 1, H)
    scale_arr = jnp.asarray(scale, dtype=jnp.float32).reshape(1)

    x_item = jnp.dtype(hidden_states.dtype).itemsize
    w_item = jnp.dtype(wd.dtype).itemsize

    # Generation-aware VMEM sizing: ~48 MiB on v7x (64 MiB physical; megacore-sharded
    # grid replicates the resident weights per TC), up to 96 MiB on v5e/v6e (128 MiB).
    vmem_cap = _vmem_capacity_bytes()
    vmem_limit = min((vmem_cap * 3) // 4, 96 * 1024 * 1024)
    resident = 2 * H * Ap * w_item + 4 * Ap + 8 * H + 64   # Wd+Wu (1-buf) + bd + buz (2-buf)
    budget = max((vmem_limit * 7) // 10 - resident, 8 * 1024)

    tm = seq_tile if seq_tile is not None else _choose_seq_tile(
        S, H, Ap, hidden_states.dtype, budget)
    assert S % tm == 0, f"seq_tile={tm} must divide S={S}"
    grid = (B, S // tm)

    cost = pl.CostEstimate(
        flops=4 * B * S * H * A,                                   # two matmuls (unpadded A)
        transcendentals=B * S * A,                                 # erf in the GELU
        bytes_accessed=(2 * B * S * H * x_item                     # x in + out
                        + 2 * H * Ap * w_item                      # Wd + Wu
                        + B * H * 4),                              # bu + z
    )

    def build(single_buffer_weights):
        # Constant-index operands never change across the grid; single-buffer them to
        # reclaim VMEM (most valuable on v7x's 64 MiB).
        const = {"pipeline_mode": pl.Buffered(1)} if single_buffer_weights else {}
        in_specs = [
            pl.BlockSpec((pl.Squeezed(), tm, H), lambda b, s: (b, s, 0)),       # x tile
            pl.BlockSpec((H, Ap), lambda b, s: (0, 0), **const),                # Wd (resident)
            pl.BlockSpec((1, Ap), lambda b, s: (0, 0), **const),                # bd (resident)
            pl.BlockSpec((Ap, H), lambda b, s: (0, 0), **const),                # Wu (resident)
            pl.BlockSpec((pl.Squeezed(), 1, H), lambda b, s: (b, 0, 0)),        # bu + z[b]
            pl.BlockSpec(memory_space=pltpu.MemorySpace.SMEM),                  # scale scalar
        ]
        return pl.pallas_call(
            _adapter_kernel,
            out_shape=jax.ShapeDtypeStruct((B, S, H), hidden_states.dtype),
            grid=grid,
            in_specs=in_specs,
            out_specs=pl.BlockSpec((pl.Squeezed(), tm, H), lambda b, s: (b, s, 0)),
            compiler_params=pltpu.CompilerParams(
                dimension_semantics=("parallel", "parallel"),   # megacore-shardable
                vmem_limit_bytes=int(vmem_limit),
            ),
            cost_estimate=cost,
            input_output_aliases=({0: 0} if donate_hidden_states else {}),
        )

    args = (hidden_states, wd, bd2, wu, buz, scale_arr)
    try:
        return build(True)(*args)
    except Exception:
        # Fallback for jax versions that reject pipeline_mode on top-level pallas_call
        # BlockSpecs: default double-buffered weights (correctness identical).
        return build(False)(*args)


def reference(hidden_states, wd, bd, wu, bu, z_proj, scale):
    x = hidden_states.astype(jnp.float32)
    down = x @ wd.astype(jnp.float32) + bd[None, None, :].astype(jnp.float32)
    act = 0.5 * down * (1.0 + jax.lax.erf(down * _INV_SQRT2))       # exact GELU
    up = act @ wu.astype(jnp.float32) + bu[None, None, :].astype(jnp.float32) \
        + z_proj.astype(jnp.float32)
    up = up * scale
    return (x + up).astype(hidden_states.dtype)


if __name__ == "__main__":
    # Small shapes consistent with the module: B=2, S=8, hidden_size=32, adapter_size=16
    B, S, H, A = 2, 8, 32, 16
    adapter_initializer_range = 0.02   # default init branch (normal weights, zero biases)
    adapter_scalar = 1.0               # AdapterConfig.adapter_scalar (float branch)

    key = jax.random.PRNGKey(0)
    k_x, k_wd, k_wu, k_z = jax.random.split(key, 4)

    hidden_states = jax.random.normal(k_x, (B, S, H), dtype=jnp.float32)
    z_proj = jax.random.normal(k_z, (B, 1, H), dtype=jnp.float32)

    # Parameters (stored transposed relative to torch nn.Linear.weight):
    #   torch down_project.weight: (A, H) -> wd: (H, A); up_project.weight: (H, A) -> wu: (A, H)
    wd = adapter_initializer_range * jax.random.normal(k_wd, (H, A), dtype=jnp.float32)
    bd = jnp.zeros((A,), dtype=jnp.float32)
    wu = adapter_initializer_range * jax.random.normal(k_wu, (A, H), dtype=jnp.float32)
    bu = jnp.zeros((H,), dtype=jnp.float32)

    # f32 path (matches the torch module bit-for-bit up to f32 matmul rounding).
    out = latent_gpt2_adapter(hidden_states, wd, bd, wu, bu, z_proj, adapter_scalar)
    out = jax.block_until_ready(out)
    ref = reference(hidden_states, wd, bd, wu, bu, z_proj, adapter_scalar)
    assert out.shape == (B, S, H)
    assert jnp.allclose(out, ref, atol=1e-4, rtol=1e-4), "f32 mismatch vs reference"

    # bf16 path (production dtype): native-dtype MXU feeds with f32 accumulation;
    # looser tolerance because the GELU output is fed to the up matmul in bf16.
    hs_bf = hidden_states.astype(jnp.bfloat16)
    z_bf = z_proj.astype(jnp.bfloat16)
    wd_bf = wd.astype(jnp.bfloat16)
    wu_bf = wu.astype(jnp.bfloat16)
    out_bf = latent_gpt2_adapter(hs_bf, wd_bf, bd, wu_bf, bu, z_bf, adapter_scalar)
    out_bf = jax.block_until_ready(out_bf)
    ref_bf = reference(hs_bf, wd_bf, bd, wu_bf, bu, z_bf, adapter_scalar)
    assert jnp.allclose(out_bf.astype(jnp.float32), ref_bf.astype(jnp.float32),
                        atol=5e-2, rtol=5e-2), "bf16 mismatch vs reference"

    print("KERNEL_OK")
</pallas_src>

<mosaic_0001>
module attributes {stable_mosaic.version = 11 : i64} {
  func.func @_adapter_kernel(%arg0: i32, %arg1: i32, %arg2: memref<1x8x32xf32, #tpu.memory_space<vmem>>, %arg3: memref<32x128xf32, #tpu.memory_space<vmem>>, %arg4: memref<1x128xf32, #tpu.memory_space<vmem>>, %arg5: memref<128x32xf32, #tpu.memory_space<vmem>>, %arg6: memref<1x1x32xf32, #tpu.memory_space<vmem>>, %arg7: memref<1xf32, #tpu.memory_space<smem>>, %arg8: memref<1x8x32xf32, #tpu.memory_space<vmem>>) attributes {dimension_semantics = [#tpu.dimension_semantics<parallel>, #tpu.dimension_semantics<parallel>], iteration_bounds = array<i64: 2, 1>, scalar_prefetch = 0 : i64, scratch_operands = 0 : i64, tpu.core_type = #tpu.core_type<tc>, window_params = [{transform_indices = @transform_0, window_bounds = array<i64: 1, 8, 32>}, {pipeline_mode = #tpu.pipeline_mode<synchronous>, transform_indices = @transform_1, window_bounds = array<i64: 32, 128>}, {pipeline_mode = #tpu.pipeline_mode<synchronous>, transform_indices = @transform_2, window_bounds = array<i64: 1, 128>}, {pipeline_mode = #tpu.pipeline_mode<synchronous>, transform_indices = @transform_3, window_bounds = array<i64: 128, 32>}, {transform_indices = @transform_4, window_bounds = array<i64: 1, 1, 32>}, {transform_indices = @transform_5, window_bounds = array<i64: 1>}, {transform_indices = @transform_6, window_bounds = array<i64: 1, 8, 32>}]} {
    %c0 = arith.constant 0 : index
    %c0_0 = arith.constant 0 : index
    %c0_1 = arith.constant 0 : index
    %0 = vector.load %arg2[%c0, %c0_0, %c0_1] : memref<1x8x32xf32, #tpu.memory_space<vmem>>, vector<1x8x32xf32>
    %1 = vector.shape_cast %0 : vector<1x8x32xf32> to vector<8x32xf32>
    %c0_2 = arith.constant 0 : index
    %c0_3 = arith.constant 0 : index
    %2 = vector.load %arg3[%c0_2, %c0_3] : memref<32x128xf32, #tpu.memory_space<vmem>>, vector<32x128xf32>
    %cst = arith.constant dense<0.000000e+00> : vector<8x128xf32>
    %3 = tpu.matmul %1, %2, %cst {dimension_numbers = #tpu.dot_dimension_numbers<[1], [0], [0], [1], [0, 0, 1, 1], [], []>} : vector<8x32xf32>, vector<32x128xf32>, vector<8x128xf32> -> vector<8x128xf32>
    %c0_4 = arith.constant 0 : index
    %c0_5 = arith.constant 0 : index
    %4 = vector.load %arg4[%c0_4, %c0_5] : memref<1x128xf32, #tpu.memory_space<vmem>>, vector<1x128xf32>
    %5 = vector.broadcast %4 : vector<1x128xf32> to vector<8x128xf32>
    %6 = arith.addf %3, %5 : vector<8x128xf32>
    %cst_6 = arith.constant 5.000000e-01 : f32
    %7 = vector.broadcast %cst_6 : f32 to vector<8x128xf32>
    %8 = arith.mulf %7, %6 : vector<8x128xf32>
    %cst_7 = arith.constant 0.707106769 : f32
    %9 = vector.broadcast %cst_7 : f32 to vector<8x128xf32>
    %10 = arith.mulf %6, %9 : vector<8x128xf32>
    %11 = math.erf %10 : vector<8x128xf32>
    %cst_8 = arith.constant 1.000000e+00 : f32
    %12 = vector.broadcast %cst_8 : f32 to vector<8x128xf32>
    %13 = arith.addf %12, %11 : vector<8x128xf32>
    %14 = arith.mulf %8, %13 : vector<8x128xf32>
    %c0_9 = arith.constant 0 : index
    %c0_10 = arith.constant 0 : index
    %15 = vector.load %arg5[%c0_9, %c0_10] : memref<128x32xf32, #tpu.memory_space<vmem>>, vector<128x32xf32>
    %cst_11 = arith.constant dense<0.000000e+00> : vector<8x32xf32>
    %16 = tpu.matmul %14, %15, %cst_11 {dimension_numbers = #tpu.dot_dimension_numbers<[1], [0], [0], [1], [0, 0, 1, 1], [], []>} : vector<8x128xf32>, vector<128x32xf32>, vector<8x32xf32> -> vector<8x32xf32>
    %c0_12 = arith.constant 0 : index
    %c0_13 = arith.constant 0 : index
    %c0_14 = arith.constant 0 : index
    %17 = vector.load %arg6[%c0_12, %c0_13, %c0_14] : memref<1x1x32xf32, #tpu.memory_space<vmem>>, vector<1x1x32xf32>
    %18 = vector.shape_cast %17 : vector<1x1x32xf32> to vector<1x32xf32>
    %19 = vector.broadcast %18 : vector<1x32xf32> to vector<8x32xf32>
    %20 = arith.addf %16, %19 : vector<8x32xf32>
    %c0_15 = arith.constant 0 : index
    %21 = memref.load %arg7[%c0_15] : memref<1xf32, #tpu.memory_space<smem>>
    %22 = vector.broadcast %21 : f32 to vector<8x32xf32>
    %23 = arith.mulf %22, %20 : vector<8x32xf32>
    %24 = arith.addf %1, %23 : vector<8x32xf32>
    %c0_16 = arith.constant 0 : index
    %c0_17 = arith.constant 0 : index
    %c0_18 = arith.constant 0 : index
    %25 = vector.load %arg8[%c0_16, %c0_17, %c0_18] : memref<1x8x32xf32, #tpu.memory_space<vmem>>, vector<1x8x32xf32>
    %26 = vector.shape_cast %25 : vector<1x8x32xf32> to vector<8x32xf32>
    %27 = vector.shape_cast %24 : vector<8x32xf32> to vector<1x8x32xf32>
    tpu.vector_store %arg8[%c0_16, %c0_17, %c0_18], %27 {strides = array<i32>} : memref<1x8x32xf32, #tpu.memory_space<vmem>>, vector<1x8x32xf32>,
    return
  }
  func.func @transform_0(%arg0: i32, %arg1: i32) -> (i32, i32, i32) {
    %c0_i32 = arith.constant 0 : i32
    %c0_i32_0 = arith.constant 0 : i32
    return %arg0, %arg1, %c0_i32 : i32, i32, i32
  }
  func.func @transform_1(%arg0: i32, %arg1: i32) -> (i32, i32) {
    %c0_i32 = arith.constant 0 : i32
    %c0_i32_0 = arith.constant 0 : i32
    %c0_i32_1 = arith.constant 0 : i32
    return %c0_i32, %c0_i32_0 : i32, i32
  }
  func.func @transform_2(%arg0: i32, %arg1: i32) -> (i32, i32) {
    %c0_i32 = arith.constant 0 : i32
    %c0_i32_0 = arith.constant 0 : i32
    %c0_i32_1 = arith.constant 0 : i32
    return %c0_i32, %c0_i32_0 : i32, i32
  }
  func.func @transform_3(%arg0: i32, %arg1: i32) -> (i32, i32) {
    %c0_i32 = arith.constant 0 : i32
    %c0_i32_0 = arith.constant 0 : i32
    %c0_i32_1 = arith.constant 0 : i32
    return %c0_i32, %c0_i32_0 : i32, i32
  }
  func.func @transform_4(%arg0: i32, %arg1: i32) -> (i32, i32, i32) {
    %c0_i32 = arith.constant 0 : i32
    %c0_i32_0 = arith.constant 0 : i32
    %c0_i32_1 = arith.constant 0 : i32
    return %arg0, %c0_i32, %c0_i32_0 : i32, i32, i32
  }
  func.func @transform_5(%arg0: i32, %arg1: i32) -> i32 {
    %c0_i32 = arith.constant 0 : i32
    %c0_i32_0 = arith.constant 0 : i32
    return %c0_i32 : i32
  }
  func.func @transform_6(%arg0: i32, %arg1: i32) -> (i32, i32, i32) {
    %c0_i32 = arith.constant 0 : i32
    %c0_i32_0 = arith.constant 0 : i32
    return %arg0, %arg1, %c0_i32 : i32, i32, i32
  }
}

module attributes {stable_mosaic.version = 11 : i64} {
  func.func @_adapter_kernel(%arg0: i32, %arg1: i32, %arg2: memref<1x8x32xf32, #tpu.memory_space<vmem>>, %arg3: memref<32x128xf32, #tpu.memory_space<vmem>>, %arg4: memref<1x128xf32, #tpu.memory_space<vmem>>, %arg5: memref<128x32xf32, #tpu.memory_space<vmem>>, %arg6: memref<1x1x32xf32, #tpu.memory_space<vmem>>, %arg7: memref<1xf32, #tpu.memory_space<smem>>, %arg8: memref<1x8x32xf32, #tpu.memory_space<vmem>>) attributes {dimension_semantics = [#tpu.dimension_semantics<parallel>, #tpu.dimension_semantics<parallel>], iteration_bounds = array<i64: 2, 1>, scalar_prefetch = 0 : i64, scratch_operands = 0 : i64, tpu.core_type = #tpu.core_type<tc>, window_params = [{transform_indices = @transform_0, window_bounds = array<i64: 1, 8, 32>}, {pipeline_mode = #tpu.pipeline_mode<synchronous>, transform_indices = @transform_1, window_bounds = array<i64: 32, 128>}, {pipeline_mode = #tpu.pipeline_mode<synchronous>, transform_indices = @transform_2, window_bounds = array<i64: 1, 128>}, {pipeline_mode = #tpu.pipeline_mode<synchronous>, transform_indices = @transform_3, window_bounds = array<i64: 128, 32>}, {transform_indices = @transform_4, window_bounds = array<i64: 1, 1, 32>}, {transform_indices = @transform_5, window_bounds = array<i64: 1>}, {transform_indices = @transform_6, window_bounds = array<i64: 1, 8, 32>}]} {
    %c0 = arith.constant 0 : index
    %c0_0 = arith.constant 0 : index
    %c0_1 = arith.constant 0 : index
    %0 = vector.load %arg2[%c0, %c0_0, %c0_1] : memref<1x8x32xf32, #tpu.memory_space<vmem>>, vector<1x8x32xf32>
    %1 = vector.shape_cast %0 : vector<1x8x32xf32> to vector<8x32xf32>
    %c0_2 = arith.constant 0 : index
    %c0_3 = arith.constant 0 : index
    %2 = vector.load %arg3[%c0_2, %c0_3] : memref<32x128xf32, #tpu.memory_space<vmem>>, vector<32x128xf32>
    %cst = arith.constant dense<0.000000e+00> : vector<8x128xf32>
    %3 = tpu.matmul %1, %2, %cst {dimension_numbers = #tpu.dot_dimension_numbers<[1], [0], [0], [1], [0, 0, 1, 1], [], []>} : vector<8x32xf32>, vector<32x128xf32>, vector<8x128xf32> -> vector<8x128xf32>
    %c0_4 = arith.constant 0 : index
    %c0_5 = arith.constant 0 : index
    %4 = vector.load %arg4[%c0_4, %c0_5] : memref<1x128xf32, #tpu.memory_space<vmem>>, vector<1x128xf32>
    %5 = vector.broadcast %4 : vector<1x128xf32> to vector<8x128xf32>
    %6 = arith.addf %3, %5 : vector<8x128xf32>
    %cst_6 = arith.constant 5.000000e-01 : f32
    %7 = vector.broadcast %cst_6 : f32 to vector<8x128xf32>
    %8 = arith.mulf %7, %6 : vector<8x128xf32>
    %cst_7 = arith.constant 0.707106769 : f32
    %9 = vector.broadcast %cst_7 : f32 to vector<8x128xf32>
    %10 = arith.mulf %6, %9 : vector<8x128xf32>
    %11 = math.erf %10 : vector<8x128xf32>
    %cst_8 = arith.constant 1.000000e+00 : f32
    %12 = vector.broadcast %cst_8 : f32 to vector<8x128xf32>
    %13 = arith.addf %12, %11 : vector<8x128xf32>
    %14 = arith.mulf %8, %13 : vector<8x128xf32>
    %c0_9 = arith.constant 0 : index
    %c0_10 = arith.constant 0 : index
    %15 = vector.load %arg5[%c0_9, %c0_10] : memref<128x32xf32, #tpu.memory_space<vmem>>, vector<128x32xf32>
    %cst_11 = arith.constant dense<0.000000e+00> : vector<8x32xf32>
    %16 = tpu.matmul %14, %15, %cst_11 {dimension_numbers = #tpu.dot_dimension_numbers<[1], [0], [0], [1], [0, 0, 1, 1], [], []>} : vector<8x128xf32>, vector<128x32xf32>, vector<8x32xf32> -> vector<8x32xf32>
    %c0_12 = arith.constant 0 : index
    %c0_13 = arith.constant 0 : index
    %c0_14 = arith.constant 0 : index
    %17 = vector.load %arg6[%c0_12, %c0_13, %c0_14] : memref<1x1x32xf32, #tpu.memory_space<vmem>>, vector<1x1x32xf32>
    %18 = vector.shape_cast %17 : vector<1x1x32xf32> to vector<1x32xf32>
    %19 = vector.broadcast %18 : vector<1x32xf32> to vector<8x32xf32>
    %20 = arith.addf %16, %19 : vector<8x32xf32>
    %c0_15 = arith.constant 0 : index
    %21 = memref.load %arg7[%c0_15] : memref<1xf32, #tpu.memory_space<smem>>
    %22 = vector.broadcast %21 : f32 to vector<8x32xf32>
    %23 = arith.mulf %22, %20 : vector<8x32xf32>
    %24 = arith.addf %1, %23 : vector<8x32xf32>
    %c0_16 = arith.constant 0 : index
    %c0_17 = arith.constant 0 : index
    %c0_18 = arith.constant 0 : index
    %25 = vector.load %arg8[%c0_16, %c0_17, %c0_18] : memref<1x8x32xf32, #tpu.memory_space<vmem>>, vector<1x8x32xf32>
    %26 = vector.shape_cast %25 : vector<1x8x32xf32> to vector<8x32xf32>
    %27 = vector.shape_cast %24 : vector<8x32xf32> to vector<1x8x32xf32>
    tpu.vector_store %arg8[%c0_16, %c0_17, %c0_18], %27 {strides = array<i32>} : memref<1x8x32xf32, #tpu.memory_space<vmem>>, vector<1x8x32xf32>,
    return
  }
  func.func @transform_0(%arg0: i32, %arg1: i32) -> (i32, i32, i32) {
    %c0_i32 = arith.constant 0 : i32
    %c0_i32_0 = arith.constant 0 : i32
    return %arg0, %arg1, %c0_i32 : i32, i32, i32
  }
  func.func @transform_1(%arg0: i32, %arg1: i32) -> (i32, i32) {
    %c0_i32 = arith.constant 0 : i32
    %c0_i32_0 = arith.constant 0 : i32
    %c0_i32_1 = arith.constant 0 : i32
    return %c0_i32, %c0_i32_0 : i32, i32
  }
  func.func @transform_2(%arg0: i32, %arg1: i32) -> (i32, i32) {
    %c0_i32 = arith.constant 0 : i32
    %c0_i32_0 = arith.constant 0 : i32
    %c0_i32_1 = arith.constant 0 : i32
    return %c0_i32, %c0_i32_0 : i32, i32
  }
  func.func @transform_3(%arg0: i32, %arg1: i32) -> (i32, i32) {
    %c0_i32 = arith.constant 0 : i32
    %c0_i32_0 = arith.constant 0 : i32
    %c0_i32_1 = arith.constant 0 : i32
    return %c0_i32, %c0_i32_0 : i32, i32
  }
  func.func @transform_4(%arg0: i32, %arg1: i32) -> (i32, i32, i32) {
    %c0_i32 = arith.constant 0 : i32
    %c0_i32_0 = arith.constant 0 : i32
    %c0_i32_1 = arith.constant 0 : i32
    return %arg0, %c0_i32, %c0_i32_0 : i32, i32, i32
  }
  func.func @transform_5(%arg0: i32, %arg1: i32) -> i32 {
    %c0_i32 = arith.constant 0 : i32
    %c0_i32_0 = arith.constant 0 : i32
    return %c0_i32 : i32
  }
  func.func @transform_6(%arg0: i32, %arg1: i32) -> (i32, i32, i32) {
    %c0_i32 = arith.constant 0 : i32
    %c0_i32_0 = arith.constant 0 : i32
    return %arg0, %arg1, %c0_i32 : i32, i32, i32
  }
}

</mosaic_0001>

<llo_original>
// kernel: tpu_custom_call.1
$region0: #{tpu_custom_call.1}
  #allocation0 [shape = 'u32[]', space=smem, size = 0x4, offset = 0x4, fixed_abs, tag = 'smem constant byte address 0x4 - core index']
  #allocation1 [shape = 'u32[144,128]{1,0:T(1,128)}', space=vmem, size = 0x12000, scoped, tag = 'internal scratch']
  #allocation2 [shape = 'f32[1]{0:T(128)S(6)}', space=smem, size = 0x200, scoped, tag = 'scoped memory for tpu_custom_call.1']
  %s0 = inlined_call_operand.vmem [shape: f32[2,8,32], index: 0, kind: input, shape index: {}]
  %s1 = inlined_call_operand.vmem [shape: f32[32,128], index: 1, kind: input, shape index: {}]
  %s2 = inlined_call_operand.vmem [shape: f32[1,128], index: 2, kind: input, shape index: {}]
  %s3 = inlined_call_operand.vmem [shape: f32[128,32], index: 3, kind: input, shape index: {}]
  %s4 = inlined_call_operand.vmem [shape: f32[2,1,32], index: 4, kind: input, shape index: {}]
  %s5 = inlined_call_operand.<no memory space> [shape: f32[1], index: 5, kind: input, shape index: {}]
  %s6 = inlined_call_operand.hbm [shape: f32[2,8,32], index: 6, kind: output, shape index: {}]
  %s7 = sld [smem:[#allocation0]]
  $region57: #{tpu_custom_call.1} parent=0
    _
  %s9 = ssub.s32 1, %s7
  %s10 = scalar_select 0, %s9, %s7
  %11 = sst [smem:[#allocation2]] %s5
  $region1: #{tpu_custom_call.1} parent=0
    #allocation3 [shape = 'u8[8192]{0}', space=vmem, size = 0x2000, scoped, tag = 'output window, operand 0']
    #allocation4 [shape = 's32[2]{0}', space=sflag, size = 0x8, scoped, tag = 'scoped memory for tpu_custom_call.1']
    %12 = vsyncpa [#allocation4], 0
    %s13 = scalar_lea.sflag [#allocation4], 1
    %14 = vsyncpa %s13, 0
    loop: start=0, step=1, limit=4
    $region2: #{tpu_custom_call.1} parent=1 // loop_pre_header
      _
    $region3: #{tpu_custom_call.1} parent=1 // loop_header
      %s16 = sphi 0, %s20
      %p17 = scmp.ge.s32.totalorder %s16, 4
      %s23 = sphi 0, %s35
      %s24 = sphi 0, %s31
      %s25 = sphi 0, %s23
      %s26 = sphi 0, %s24
      %s27 = sphi 0, %s25
      %s28 = sphi 0, %s26
      %s40 = sphi 0, %s42
      %s43 = sphi 0, %s40
      %s44 = sphi 0, %s43
      %s60 = sphi 0, %s44
      %s64 = sphi 0, %s64
      %s66 = sphi 0, %s64
      %s67 = sphi 0, %s66
      %s81 = sphi 0, %s67
      %s85 = sphi 0, %s85
      %s87 = sphi 0, %s85
      %s88 = sphi 0, %s87
      %s102 = sphi 0, %s88
      %s106 = sphi 0, %s106
      %s108 = sphi 0, %s106
      %s109 = sphi 0, %s108
      %s123 = sphi 0, %s109
      %s129 = sphi 0, %s131
      %s132 = sphi 0, %s129
      %s133 = sphi 0, %s132
      %s149 = sphi 0, %s133
      %s153 = sphi 0, %s153
      %s155 = sphi 0, %s153
      %s156 = sphi 0, %s155
      %s170 = sphi 0, %s156
      %s178 = sphi 0, %s180
      %s181 = sphi 0, %s178
      %s182 = sphi 0, %s181
      %s198 = sphi 0, %s182
    $region4: #{tpu_custom_call.1} parent=1 // loop_header_branch
      %19 = sbr.rel (%p17) target = $region8
    $region5: #{tpu_custom_call.1} parent=1 // loop_body
      %s21 = ssub.s32 %s16, 1
      %s22 = ssub.s32 %s16, 2
      %s29 = sadd.s32 1, %s24
      %p30 = scmp.ge.s32.totalorder %s29, 1
      %s31 = scalar_select %p30, 0, %s29
      %s32 = sadd.s32 1, %s23
      %s33 = scalar_select %p30, %s32, %s23
      %p34 = scmp.ge.s32.totalorder %s33, 2
      %s35 = scalar_select %p34, 0, %s33
      %s36 = ssub.s32 %s23, %s35
      %s37 = ssub.s32 %s24, %s31
      %s38 = sor.u32 %s36, %s37
      %p39 = scmp.eq.s32.totalorder %s38, 0
      %s41 = sadd.s32 %s40, 1
      %s42 = scalar_select %p39, %s40, %s41
      %p45 = pneg %p39
      %p46 = scmp.eq.s32.totalorder %s16, 1
      %p47 = por %p45, %p46
      %p48 = scmp.ne.s32.totalorder %s40, %s43
      %p49 = scmp.eq.s32.totalorder %s16, 0
      %p50 = por %p48, %p49
      %p51 = scmp.ne.s32.totalorder %s40, %s43
      %p52 = scmp.eq.s32.totalorder %s21, 1
      %p53 = por %p51, %p52
      %p54 = scmp.ne.s32.totalorder %s43, %s44
      %p55 = scmp.eq.s32.totalorder %s21, 0
      %p56 = por %p54, %p55
      %p57 = scmp.ne.s32.totalorder %s43, %s44
      %p58 = scmp.eq.s32.totalorder %s22, 1
      %p59 = por %p57, %p58
      %p61 = scmp.ne.s32.totalorder %s44, %s60
      %p62 = scmp.eq.s32.totalorder %s22, 0
      %p63 = por %p61, %p62
      %s65 = sadd.s32 %s64, 1
      %p68 = scmp.eq.s32.totalorder %s16, 1
      %p69 = scmp.ne.s32.totalorder %s64, %s66
      %p70 = scmp.eq.s32.totalorder %s16, 0
      %p71 = por %p69, %p70
      %p72 = scmp.ne.s32.totalorder %s64, %s66
      %p73 = scmp.eq.s32.totalorder %s21, 1
      %p74 = por %p72, %p73
      %p75 = scmp.ne.s32.totalorder %s66, %s67
      %p76 = scmp.eq.s32.totalorder %s21, 0
      %p77 = por %p75, %p76
      %p78 = scmp.ne.s32.totalorder %s66, %s67
      %p79 = scmp.eq.s32.totalorder %s22, 1
      %p80 = por %p78, %p79
      %p82 = scmp.ne.s32.totalorder %s67, %s81
      %p83 = scmp.eq.s32.totalorder %s22, 0
      %p84 = por %p82, %p83
      %s86 = sadd.s32 %s85, 1
      %p89 = scmp.eq.s32.totalorder %s16, 1
      %p90 = scmp.ne.s32.totalorder %s85, %s87
      %p91 = scmp.eq.s32.totalorder %s16, 0
      %p92 = por %p90, %p91
      %p93 = scmp.ne.s32.totalorder %s85, %s87
      %p94 = scmp.eq.s32.totalorder %s21, 1
      %p95 = por %p93, %p94
      %p96 = scmp.ne.s32.totalorder %s87, %s88
      %p97 = scmp.eq.s32.totalorder %s21, 0
      %p98 = por %p96, %p97
      %p99 = scmp.ne.s32.totalorder %s87, %s88
      %p100 = scmp.eq.s32.totalorder %s22, 1
      %p101 = por %p99, %p100
      %p103 = scmp.ne.s32.totalorder %s88, %s102
      %p104 = scmp.eq.s32.totalorder %s22, 0
      %p105 = por %p103, %p104
      %s107 = sadd.s32 %s106, 1
      %p110 = scmp.eq.s32.totalorder %s16, 1
      %p111 = scmp.ne.s32.totalorder %s106, %s108
      %p112 = scmp.eq.s32.totalorder %s16, 0
      %p113 = por %p111, %p112
      %p114 = scmp.ne.s32.totalorder %s106, %s108
      %p115 = scmp.eq.s32.totalorder %s21, 1
      %p116 = por %p114, %p115
      %p117 = scmp.ne.s32.totalorder %s108, %s109
      %p118 = scmp.eq.s32.totalorder %s21, 0
      %p119 = por %p117, %p118
      %p120 = scmp.ne.s32.totalorder %s108, %s109
      %p121 = scmp.eq.s32.totalorder %s22, 1
      %p122 = por %p120, %p121
      %p124 = scmp.ne.s32.totalorder %s109, %s123
      %p125 = scmp.eq.s32.totalorder %s22, 0
      %p126 = por %p124, %p125
      %s127 = ssub.s32 %s23, %s35
      %p128 = scmp.eq.s32.totalorder %s127, 0
      %s130 = sadd.s32 %s129, 1
      %s131 = scalar_select %p128, %s129, %s130
      %p134 = pneg %p128
      %p135 = scmp.eq.s32.totalorder %s16, 1
      %p136 = por %p134, %p135
      %p137 = scmp.ne.s32.totalorder %s129, %s132
      %p138 = scmp.eq.s32.totalorder %s16, 0
      %p139 = por %p137, %p138
      %p140 = scmp.ne.s32.totalorder %s129, %s132
      %p141 = scmp.eq.s32.totalorder %s21, 1
      %p142 = por %p140, %p141
      %p143 = scmp.ne.s32.totalorder %s132, %s133
      %p144 = scmp.eq.s32.totalorder %s21, 0
      %p145 = por %p143, %p144
      %p146 = scmp.ne.s32.totalorder %s132, %s133
      %p147 = scmp.eq.s32.totalorder %s22, 1
      %p148 = por %p146, %p147
      %p150 = scmp.ne.s32.totalorder %s133, %s149
      %p151 = scmp.eq.s32.totalorder %s22, 0
      %p152 = por %p150, %p151
      %s154 = sadd.s32 %s153, 1
      %p157 = scmp.eq.s32.totalorder %s16, 1
      %p158 = scmp.ne.s32.totalorder %s153, %s155
      %p159 = scmp.eq.s32.totalorder %s16, 0
      %p160 = por %p158, %p159
      %p161 = scmp.ne.s32.totalorder %s153, %s155
      %p162 = scmp.eq.s32.totalorder %s21, 1
      %p163 = por %p161, %p162
      %p164 = scmp.ne.s32.totalorder %s155, %s156
      %p165 = scmp.eq.s32.totalorder %s21, 0
      %p166 = por %p164, %p165
      %p167 = scmp.ne.s32.totalorder %s155, %s156
      %p168 = scmp.eq.s32.totalorder %s22, 1
      %p169 = por %p167, %p168
      %p171 = scmp.ne.s32.totalorder %s156, %s170
      %p172 = scmp.eq.s32.totalorder %s22, 0
      %p173 = por %p171, %p172
      %s174 = ssub.s32 %s23, %s35
      %s175 = ssub.s32 %s24, %s31
      %s176 = sor.u32 %s174, %s175
      %p177 = scmp.eq.s32.totalorder %s176, 0
      %s179 = sadd.s32 %s178, 1
      %s180 = scalar_select %p177, %s178, %s179
      %p183 = pneg %p177
      %p184 = scmp.eq.s32.totalorder %s16, 1
      %p185 = por %p183, %p184
      %p186 = scmp.ne.s32.totalorder %s178, %s181
      %p187 = scmp.eq.s32.totalorder %s16, 0
      %p188 = por %p186, %p187
      %p189 = scmp.ne.s32.totalorder %s178, %s181
      %p190 = scmp.eq.s32.totalorder %s21, 1
      %p191 = por %p189, %p190
      %p192 = scmp.ne.s32.totalorder %s181, %s182
      %p193 = scmp.eq.s32.totalorder %s21, 0
      %p194 = por %p192, %p193
      %p195 = scmp.ne.s32.totalorder %s181, %s182
      %p196 = scmp.eq.s32.totalorder %s22, 1
      %p197 = por %p195, %p196
      %p199 = scmp.ne.s32.totalorder %s182, %s198
      %p200 = scmp.eq.s32.totalorder %s22, 0
      %p201 = por %p199, %p200
      %p202 = scmp.le.s32.totalorder 1, %s16
      %p203 = scmp.lt.s32.totalorder %s16, 3
      %p204 = pnand %p202, %p203
      %p205 = pneg %p204
      // Predicated region
      $region9: #{tpu_custom_call.1} parent=5 // pred_check
        _
      $region10: #{tpu_custom_call.1} parent=5 // pred_check_branch
        %207 = sbr.rel (%p204) target = $region12
      $region11: #{tpu_custom_call.1} parent=5 // pred_region
        %s208 = ssub.s32 %s16, 1
        // Predicated region
        $region13: #{tpu_custom_call.1} parent=11 // pred_check
          %p209 = pneg %p77
        $region14: #{tpu_custom_call.1} parent=11 // pred_check_branch
          %211 = sbr.rel (%p209) target = $region16
        $region15: #{tpu_custom_call.1} parent=11 // pred_region
          _
        $region16: #{tpu_custom_call.1} parent=11 // pred_fallthru
          _
        // Predicated region
        $region17: #{tpu_custom_call.1} parent=11 // pred_check
          %p212 = pneg %p98
        $region18: #{tpu_custom_call.1} parent=11 // pred_check_branch
          %214 = sbr.rel (%p212) target = $region20
        $region19: #{tpu_custom_call.1} parent=11 // pred_region
          _
        $region20: #{tpu_custom_call.1} parent=11 // pred_fallthru
          _
        // Predicated region
        $region21: #{tpu_custom_call.1} parent=11 // pred_check
          %p215 = pneg %p119
        $region22: #{tpu_custom_call.1} parent=11 // pred_check_branch
          %217 = sbr.rel (%p215) target = $region24
        $region23: #{tpu_custom_call.1} parent=11 // pred_region
          _
        $region24: #{tpu_custom_call.1} parent=11 // pred_fallthru
          _
        // Predicated region
        $region25: #{tpu_custom_call.1} parent=11 // pred_check
          %p218 = pneg %p166
        $region26: #{tpu_custom_call.1} parent=11 // pred_check_branch
          %220 = sbr.rel (%p218) target = $region28
        $region27: #{tpu_custom_call.1} parent=11 // pred_region
          _
        $region28: #{tpu_custom_call.1} parent=11 // pred_fallthru
          _
      $region12: #{tpu_custom_call.1} parent=5 // pred_fallthru
        _
      %p221 = scmp.lt.s32.totalorder %s16, 2
      // Predicated region
      $region29: #{tpu_custom_call.1} parent=5 // pred_check
        %p222 = pneg %p221
      $region30: #{tpu_custom_call.1} parent=5 // pred_check_branch
        %224 = sbr.rel (%p222) target = $region32
      $region31: #{tpu_custom_call.1} parent=5 // pred_region
        // Predicated region
        $region33: #{tpu_custom_call.1} parent=31 // pred_check
          %p225 = pneg %p50
        $region34: #{tpu_custom_call.1} parent=31 // pred_check_branch
          %227 = sbr.rel (%p225) target = $region36
        $region35: #{tpu_custom_call.1} parent=31 // pred_region
          %p228 = scmp.lt.s32.totalorder %s23, 1
          %s229 = scalar_select %p228, %s23, 1
          %p230 = scmp.lt.s32.totalorder %s24, 0
          %s231 = scalar_select %p230, %s24, 0
          %s232 = sadd.s32 %s231, %s229
          %s233 = smul.addr %s232, 8
          %s234 = scalar_lea.vmem %s0, %s233
        $region36: #{tpu_custom_call.1} parent=31 // pred_fallthru
          _
        // Predicated region
        $region37: #{tpu_custom_call.1} parent=31 // pred_check
          %p235 = pneg %p139
        $region38: #{tpu_custom_call.1} parent=31 // pred_check_branch
          %237 = sbr.rel (%p235) target = $region40
        $region39: #{tpu_custom_call.1} parent=31 // pred_region
          %p238 = scmp.lt.s32.totalorder %s23, 1
          %s239 = scalar_select %p238, %s23, 1
          %s240 = scalar_lea.vmem %s4, %s239
        $region40: #{tpu_custom_call.1} parent=31 // pred_fallthru
          _
      $region32: #{tpu_custom_call.1} parent=5 // pred_fallthru
        _
      %p241 = scmp.le.s32.totalorder 1, %s16
      %p242 = scmp.lt.s32.totalorder %s16, 3
      %p243 = pnand %p241, %p242
      %p244 = pneg %p243
      // Predicated region
      $region41: #{tpu_custom_call.1} parent=5 // pred_check
        _
      $region42: #{tpu_custom_call.1} parent=5 // pred_check_branch
        %246 = sbr.rel (%p243) target = $region44
      $region43: #{tpu_custom_call.1} parent=5 // pred_region
        %s247 = ssub.s32 %s16, 1
        %p248 = scmp.lt.s32.totalorder %s25, 1
        %s249 = scalar_select %p248, %s25, 1
        %p250 = scmp.lt.s32.totalorder %s26, 0
        %s251 = scalar_select %p250, %s26, 0
        %s252 = sadd.s32 %s251, %s249
        %s253 = smul.addr %s252, 8
        %s254 = scalar_lea.vmem %s0, %s253
        %p255 = pneg %p56
        %p256 = pneg %p53
        %p257 = pneg %p77
        %p258 = pneg %p74
        %p259 = pneg %p98
        %p260 = pneg %p95
        %p261 = pneg %p119
        %p262 = pneg %p116
        %p263 = scmp.lt.s32.totalorder %s25, 1
        %s264 = scalar_select %p263, %s25, 1
        %s265 = scalar_lea.vmem %s4, %s264
        %p266 = pneg %p145
        %p267 = pneg %p142
        %p268 = pneg %p166
        %p269 = pneg %p163
        %p270 = pneg %p194
        %p271 = pneg %p191
        %s272 = sand.u32 %s181, 1
        %s273 = scalar_lea.sflag [#allocation4], %s272
        %s274 = sand.u32 %s181, 1
        %s275 = smul.addr %s274, 8
        %s276 = scalar_lea.vmem [#allocation3], %s275
        %p277 = scmp.lt.s32.totalorder %s25, 1
        %s278 = scalar_select %p277, %s25, 1
        %p279 = scmp.lt.s32.totalorder %s26, 0
        %s280 = scalar_select %p279, %s26, 0
        %s281 = sadd.s32 %s280, %s278
        %s282 = smul.addr %s281, 8
        %s283 = scalar_lea.vmem %s0, %s282
        %p284 = scmp.lt.s32.totalorder %s25, 1
        %s285 = scalar_select %p284, %s25, 1
        %s286 = scalar_lea.vmem %s4, %s285
        %v287 = vld [vmem:[%s283] sm:$0xff]
        %v288 = vld [vmem:[%s1] sm:$0xff]
        %v289 = vld [vmem:[%s1 + $0x8] sm:$0xff]
        %v290 = vld [vmem:[%s1 + $0x10] sm:$0xff]
        %v291 = vld [vmem:[%s1 + $0x18] sm:$0xff]
        %v292 = vld [vmem:[%s2] sm:$0x1]
        %v294 = vlaneseq
        %v295 = vshrl.u32 %v294, 7
        %v296 = vsub.s32 0, %v295
        %v297 = vrot.slane %v292, %v296
        %vm299 = vcmask 261120
        %v301 = vsel %vm299, %v287, 0
        %303 = vmatprep.subr.mxu0 0.0
        %304 = vmatpush1.msra.mxu0 0.0
        %305 = vmatprep.subr.mxu0 0.0
        %306 = vmatpush1.msra.mxu0 0.0
        %307 = vmatprep.subr.mxu0 0.0
        %308 = vmatpush1.msra.mxu0 0.0
        %309 = vmatprep.subr.mxu0 0.0
        %310 = vmatpush1.msra.mxu0 0.0
        %311 = vmatprep.subr.mxu0 0.0
        %312 = vmatpush1.msra.mxu0 0.0
        %313 = vmatprep.subr.mxu0 0.0
        %314 = vmatpush1.msra.mxu0 0.0
        %315 = vmatprep.subr.mxu0 0.0
        %316 = vmatpush1.msra.mxu0 0.0
        %317 = vmatprep.subr.mxu0 0.0
        %318 = vmatpush1.msra.mxu0 0.0
        %319 = vmatprep.subr.mxu0 0.0
        %320 = vmatpush1.msra.mxu0 0.0
        %321 = vmatprep.subr.mxu0 0.0
        %322 = vmatpush1.msra.mxu0 0.0
        %323 = vmatprep.subr.mxu0 0.0
        %324 = vmatpush1.msra.mxu0 0.0
        %325 = vmatprep.subr.mxu0 0.0
        %326 = vmatpush1.msra.mxu0 0.0
        %327 = vmatprep.subr.mxu0 0.0
        %328 = vmatpush1.msra.mxu0 %v291
        %329 = vmatprep.subr.mxu0 0.0
        %330 = vmatpush1.msra.mxu0 %v290
        %331 = vmatprep.subr.mxu0 0.0
        %332 = vmatpush1.msra.mxu0 %v289
        %333 = vmatprep.subr.mxu0 0.0
        %334 = vmatpush1.msra.mxu0 %v288
        %335 = vmatprep.subr.mxu0 0.0
        %336 = vmatpush2.msra.mxu0 0.0
        %337 = vmatprep.subr.mxu0 0.0
        %338 = vmatpush2.msra.mxu0 0.0
        %339 = vmatprep.subr.mxu0 0.0
        %340 = vmatpush2.msra.mxu0 0.0
        %341 = vmatprep.subr.mxu0 0.0
        %342 = vmatpush2.msra.mxu0 0.0
        %343 = vmatprep.subr.mxu0 0.0
        %344 = vmatpush2.msra.mxu0 0.0
        %345 = vmatprep.subr.mxu0 0.0
        %346 = vmatpush2.msra.mxu0 0.0
        %347 = vmatprep.subr.mxu0 0.0
        %348 = vmatpush2.msra.mxu0 0.0
        %349 = vmatprep.subr.mxu0 0.0
        %350 = vmatpush2.msra.mxu0 0.0
        %351 = vmatprep.subr.mxu0 0.0
        %352 = vmatpush2.msra.mxu0 0.0
        %353 = vmatprep.subr.mxu0 0.0
        %354 = vmatpush2.msra.mxu0 0.0
        %355 = vmatprep.subr.mxu0 0.0
        %356 = vmatpush2.msra.mxu0 0.0
        %357 = vmatprep.subr.mxu0 0.0
        %358 = vmatpush2.msra.mxu0 0.0
        %359 = vmatprep.subr.mxu0 0.0
        %360 = vmatpush2.msra.mxu0 0.0
        %361 = vmatprep.subr.mxu0 0.0
        %362 = vmatpush2.msra.mxu0 0.0
        %363 = vmatprep.subr.mxu0 0.0
        %364 = vmatpush2.msra.mxu0 0.0
        %365 = vmatprep.subr.mxu0 0.0
        %366 = vmatpush2.msra.mxu0 0.0
        %367 = vmatprep.mubr.f32.mxu0 0.0
        %368 = vmatmul.mubr.f32.gmra.mxu0 %v301
        %v369 = vpop.f32.mrf.mxu0
        %v370 = vadd.f32 %v297, %v369
        %v371 = vpop.f32.mrf.mxu0
        %372 = vdwg.mxu0
        %v373 = vmul.f32 %v370, 0.5
        %v374 = vmul.f32 %v370, 0.70710677
        %v375 = verf.f32.pop %v374
        %v376 = vadd.f32 %v375, 1.0
        %v377 = vmul.f32 %v373, %v376
        %v378 = vld [vmem:[%s3] sm:$0xff]
        %v379 = vld [vmem:[%s3 + $0x8] sm:$0xff]
        %v380 = vld [vmem:[%s3 + $0x10] sm:$0xff]
        %v381 = vld [vmem:[%s3 + $0x18] sm:$0xff]
        %v382 = vld [vmem:[%s3 + $0x20] sm:$0xff]
        %v383 = vld [vmem:[%s3 + $0x28] sm:$0xff]
        %v384 = vld [vmem:[%s3 + $0x30] sm:$0xff]
        %v385 = vld [vmem:[%s3 + $0x38] sm:$0xff]
        %v386 = vld [vmem:[%s3 + $0x40] sm:$0xff]
        %v387 = vld [vmem:[%s3 + $0x48] sm:$0xff]
        %v388 = vld [vmem:[%s3 + $0x50] sm:$0xff]
        %v389 = vld [vmem:[%s3 + $0x58] sm:$0xff]
        %v390 = vld [vmem:[%s3 + $0x60] sm:$0xff]
        %v391 = vld [vmem:[%s3 + $0x68] sm:$0xff]
        %v392 = vld [vmem:[%s3 + $0x70] sm:$0xff]
        %v393 = vld [vmem:[%s3 + $0x78] sm:$0xff]
        %v394 = vld [vmem:[%s286] sm:$0x1]
        %v396 = vlaneseq
        %v397 = vshrl.u32 %v396, 7
        %v398 = vsub.s32 0, %v397
        %v399 = vrot.slane %v394, %v398
        %401 = vmatprep.subr.mxu0 0.0
        %402 = vmatpush1.msra.mxu0 %v393
        %403 = vmatprep.subr.mxu0 0.0
        %404 = vmatpush1.msra.mxu0 %v392
        %405 = vmatprep.subr.mxu0 0.0
        %406 = vmatpush1.msra.mxu0 %v391
        %407 = vmatprep.subr.mxu0 0.0
        %408 = vmatpush1.msra.mxu0 %v390
        %409 = vmatprep.subr.mxu0 0.0
        %410 = vmatpush1.msra.mxu0 %v389
        %411 = vmatprep.subr.mxu0 0.0
        %412 = vmatpush1.msra.mxu0 %v388
        %413 = vmatprep.subr.mxu0 0.0
        %414 = vmatpush1.msra.mxu0 %v387
        %415 = vmatprep.subr.mxu0 0.0
        %416 = vmatpush1.msra.mxu0 %v386
        %417 = vmatprep.subr.mxu0 0.0
        %418 = vmatpush1.msra.mxu0 %v385
        %419 = vmatprep.subr.mxu0 0.0
        %420 = vmatpush1.msra.mxu0 %v384
        %421 = vmatprep.subr.mxu0 0.0
        %422 = vmatpush1.msra.mxu0 %v383
        %423 = vmatprep.subr.mxu0 0.0
        %424 = vmatpush1.msra.mxu0 %v382
        %425 = vmatprep.subr.mxu0 0.0
        %426 = vmatpush1.msra.mxu0 %v381
        %427 = vmatprep.subr.mxu0 0.0
        %428 = vmatpush1.msra.mxu0 %v380
        %429 = vmatprep.subr.mxu0 0.0
        %430 = vmatpush1.msra.mxu0 %v379
        %431 = vmatprep.subr.mxu0 0.0
        %432 = vmatpush1.msra.mxu0 %v378
        %433 = vmatprep.subr.mxu0 0.0
        %434 = vmatpush2.msra.mxu0 0.0
        %435 = vmatprep.subr.mxu0 0.0
        %436 = vmatpush2.msra.mxu0 0.0
        %437 = vmatprep.subr.mxu0 0.0
        %438 = vmatpush2.msra.mxu0 0.0
        %439 = vmatprep.subr.mxu0 0.0
        %440 = vmatpush2.msra.mxu0 0.0
        %441 = vmatprep.subr.mxu0 0.0
        %442 = vmatpush2.msra.mxu0 0.0
        %443 = vmatprep.subr.mxu0 0.0
        %444 = vmatpush2.msra.mxu0 0.0
        %445 = vmatprep.subr.mxu0 0.0
        %446 = vmatpush2.msra.mxu0 0.0
        %447 = vmatprep.subr.mxu0 0.0
        %448 = vmatpush2.msra.mxu0 0.0
        %449 = vmatprep.subr.mxu0 0.0
        %450 = vmatpush2.msra.mxu0 0.0
        %451 = vmatprep.subr.mxu0 0.0
        %452 = vmatpush2.msra.mxu0 0.0
        %453 = vmatprep.subr.mxu0 0.0
        %454 = vmatpush2.msra.mxu0 0.0
        %455 = vmatprep.subr.mxu0 0.0
        %456 = vmatpush2.msra.mxu0 0.0
        %457 = vmatprep.subr.mxu0 0.0
        %458 = vmatpush2.msra.mxu0 0.0
        %459 = vmatprep.subr.mxu0 0.0
        %460 = vmatpush2.msra.mxu0 0.0
        %461 = vmatprep.subr.mxu0 0.0
        %462 = vmatpush2.msra.mxu0 0.0
        %463 = vmatprep.subr.mxu0 0.0
        %464 = vmatpush2.msra.mxu0 0.0
        %465 = vmatprep.mubr.f32.mxu0 0.0
        %466 = vmatmul.mubr.f32.gmra.mxu0 %v377
        %v467 = vpop.f32.mrf.mxu0
        %v468 = vadd.f32 %v399, %v467
        %v469 = vpop.f32.mrf.mxu0
        %470 = vdwg.mxu0
        %s471 = sld [smem:[#allocation2]]
        %v472 = vstv %s471
        %v473 = vmul.f32 %v472, %v468
        %v474 = vadd.f32 %v287, %v473
        %475 = vst.msk [vmem:[%s276] sm:$0xff] %vm299, %v474
        %s476 = sand.u32 %s181, 1
        %s477 = scalar_lea.sflag [#allocation4], %s476
        %s478 = sand.u32 %s181, 1
        %s479 = smul.addr %s478, 8
        %s480 = scalar_lea.vmem [#allocation3], %s479
        // Predicated region
        $region45: #{tpu_custom_call.1} parent=43 // pred_check
          %p481 = pneg %p191
        $region46: #{tpu_custom_call.1} parent=43 // pred_check_branch
          %483 = sbr.rel (%p481) target = $region48
        $region47: #{tpu_custom_call.1} parent=43 // pred_region
          %s485 = ssub.s32 128, 128
          %486 = vsyncadd %s477, %s485
          %s487 = sadd.s32 %s26, %s25
          %s488 = smul.addr %s487, 128
          %s489 = scalar_lea.hbm %s6, %s488
          %s491 = sshll.u32 %s480, 4
          %s492 = int_to_ptr.vmem [resolvable:$true] %s491
          %494 = dma.vmem_to_hbm [thread:$0]  %s492, 128, %s489, %s477
        $region48: #{tpu_custom_call.1} parent=43 // pred_fallthru
          _
      $region44: #{tpu_custom_call.1} parent=5 // pred_fallthru
        _
      %p495 = scmp.le.s32.totalorder 2, %s16
      // Predicated region
      $region49: #{tpu_custom_call.1} parent=5 // pred_check
        %p496 = pneg %p495
      $region50: #{tpu_custom_call.1} parent=5 // pred_check_branch
        %498 = sbr.rel (%p496) target = $region52
      $region51: #{tpu_custom_call.1} parent=5 // pred_region
        %s499 = ssub.s32 %s16, 2
        // Predicated region
        $region53: #{tpu_custom_call.1} parent=51 // pred_check
          %p500 = pneg %p197
        $region54: #{tpu_custom_call.1} parent=51 // pred_check_branch
          %502 = sbr.rel (%p500) target = $region56
        $region55: #{tpu_custom_call.1} parent=51 // pred_region
          %s503 = sand.u32 %s182, 1
          %s504 = scalar_lea.sflag [#allocation4], %s503
          %s505 = sand.u32 %s182, 1
          %s506 = smul.addr %s505, 8
          %s507 = scalar_lea.vmem [#allocation3], %s506
          %508 = dma.done %s504, 128
        $region56: #{tpu_custom_call.1} parent=51 // pred_fallthru
          _
      $region52: #{tpu_custom_call.1} parent=5 // pred_fallthru
        _
    $region6: #{tpu_custom_call.1} parent=1 // loop_footer
      %s20 = sadd.s32 1, %s16
    $region7: #{tpu_custom_call.1} parent=1 // loop_footer_branch
      %15 = sbr.rel target = $region3
    $region8: #{tpu_custom_call.1} parent=1 // loop_exit
      _
    %509 = vsyncpa [#allocation4], 1
    %s510 = scalar_lea.sflag [#allocation4], 1
    %511 = vsyncpa %s510, 1

// kernel: tpu_custom_call.1
$region0: #{tpu_custom_call.1}
  #allocation0 [shape = 'u32[]', space=smem, size = 0x4, offset = 0x4, fixed_abs, tag = 'smem constant byte address 0x4 - core index']
  #allocation1 [shape = 'u32[144,128]{1,0:T(1,128)}', space=vmem, size = 0x12000, scoped, tag = 'internal scratch']
  #allocation2 [shape = 'f32[1]{0:T(128)S(6)}', space=smem, size = 0x200, scoped, tag = 'scoped memory for tpu_custom_call.1']
  %s0 = inlined_call_operand.vmem [shape: f32[2,8,32], index: 0, kind: input, shape index: {}]
  %s1 = inlined_call_operand.vmem [shape: f32[32,128], index: 1, kind: input, shape index: {}]
  %s2 = inlined_call_operand.vmem [shape: f32[1,128], index: 2, kind: input, shape index: {}]
  %s3 = inlined_call_operand.vmem [shape: f32[128,32], index: 3, kind: input, shape index: {}]
  %s4 = inlined_call_operand.vmem [shape: f32[2,1,32], index: 4, kind: input, shape index: {}]
  %s5 = inlined_call_operand.<no memory space> [shape: f32[1], index: 5, kind: input, shape index: {}]
  %s6 = inlined_call_operand.hbm [shape: f32[2,8,32], index: 6, kind: output, shape index: {}]
  %s7 = sld [smem:[#allocation0]]
  $region57: #{tpu_custom_call.1} parent=0
    _
  %s9 = ssub.s32 1, %s7
  %s10 = scalar_select 0, %s9, %s7
  %11 = sst [smem:[#allocation2]] %s5
  $region1: #{tpu_custom_call.1} parent=0
    #allocation3 [shape = 'u8[8192]{0}', space=vmem, size = 0x2000, scoped, tag = 'output window, operand 0']
    #allocation4 [shape = 's32[2]{0}', space=sflag, size = 0x8, scoped, tag = 'scoped memory for tpu_custom_call.1']
    %12 = vsyncpa [#allocation4], 0
    %s13 = scalar_lea.sflag [#allocation4], 1
    %14 = vsyncpa %s13, 0
    loop: start=0, step=1, limit=4
    $region2: #{tpu_custom_call.1} parent=1 // loop_pre_header
      _
    $region3: #{tpu_custom_call.1} parent=1 // loop_header
      %s16 = sphi 0, %s20
      %p17 = scmp.ge.s32.totalorder %s16, 4
      %s23 = sphi 0, %s35
      %s24 = sphi 0, %s31
      %s25 = sphi 0, %s23
      %s26 = sphi 0, %s24
      %s27 = sphi 0, %s25
      %s28 = sphi 0, %s26
      %s40 = sphi 0, %s42
      %s43 = sphi 0, %s40
      %s44 = sphi 0, %s43
      %s60 = sphi 0, %s44
      %s64 = sphi 0, %s64
      %s66 = sphi 0, %s64
      %s67 = sphi 0, %s66
      %s81 = sphi 0, %s67
      %s85 = sphi 0, %s85
      %s87 = sphi 0, %s85
      %s88 = sphi 0, %s87
      %s102 = sphi 0, %s88
      %s106 = sphi 0, %s106
      %s108 = sphi 0, %s106
      %s109 = sphi 0, %s108
      %s123 = sphi 0, %s109
      %s129 = sphi 0, %s131
      %s132 = sphi 0, %s129
      %s133 = sphi 0, %s132
      %s149 = sphi 0, %s133
      %s153 = sphi 0, %s153
      %s155 = sphi 0, %s153
      %s156 = sphi 0, %s155
      %s170 = sphi 0, %s156
      %s178 = sphi 0, %s180
      %s181 = sphi 0, %s178
      %s182 = sphi 0, %s181
      %s198 = sphi 0, %s182
    $region4: #{tpu_custom_call.1} parent=1 // loop_header_branch
      %19 = sbr.rel (%p17) target = $region8
    $region5: #{tpu_custom_call.1} parent=1 // loop_body
      %s21 = ssub.s32 %s16, 1
      %s22 = ssub.s32 %s16, 2
      %s29 = sadd.s32 1, %s24
      %p30 = scmp.ge.s32.totalorder %s29, 1
      %s31 = scalar_select %p30, 0, %s29
      %s32 = sadd.s32 1, %s23
      %s33 = scalar_select %p30, %s32, %s23
      %p34 = scmp.ge.s32.totalorder %s33, 2
      %s35 = scalar_select %p34, 0, %s33
      %s36 = ssub.s32 %s23, %s35
      %s37 = ssub.s32 %s24, %s31
      %s38 = sor.u32 %s36, %s37
      %p39 = scmp.eq.s32.totalorder %s38, 0
      %s41 = sadd.s32 %s40, 1
      %s42 = scalar_select %p39, %s40, %s41
      %p45 = pneg %p39
      %p46 = scmp.eq.s32.totalorder %s16, 1
      %p47 = por %p45, %p46
      %p48 = scmp.ne.s32.totalorder %s40, %s43
      %p49 = scmp.eq.s32.totalorder %s16, 0
      %p50 = por %p48, %p49
      %p51 = scmp.ne.s32.totalorder %s40, %s43
      %p52 = scmp.eq.s32.totalorder %s21, 1
      %p53 = por %p51, %p52
      %p54 = scmp.ne.s32.totalorder %s43, %s44
      %p55 = scmp.eq.s32.totalorder %s21, 0
      %p56 = por %p54, %p55
      %p57 = scmp.ne.s32.totalorder %s43, %s44
      %p58 = scmp.eq.s32.totalorder %s22, 1
      %p59 = por %p57, %p58
      %p61 = scmp.ne.s32.totalorder %s44, %s60
      %p62 = scmp.eq.s32.totalorder %s22, 0
      %p63 = por %p61, %p62
      %s65 = sadd.s32 %s64, 1
      %p68 = scmp.eq.s32.totalorder %s16, 1
      %p69 = scmp.ne.s32.totalorder %s64, %s66
      %p70 = scmp.eq.s32.totalorder %s16, 0
      %p71 = por %p69, %p70
      %p72 = scmp.ne.s32.totalorder %s64, %s66
      %p73 = scmp.eq.s32.totalorder %s21, 1
      %p74 = por %p72, %p73
      %p75 = scmp.ne.s32.totalorder %s66, %s67
      %p76 = scmp.eq.s32.totalorder %s21, 0
      %p77 = por %p75, %p76
      %p78 = scmp.ne.s32.totalorder %s66, %s67
      %p79 = scmp.eq.s32.totalorder %s22, 1
      %p80 = por %p78, %p79
      %p82 = scmp.ne.s32.totalorder %s67, %s81
      %p83 = scmp.eq.s32.totalorder %s22, 0
      %p84 = por %p82, %p83
      %s86 = sadd.s32 %s85, 1
      %p89 = scmp.eq.s32.totalorder %s16, 1
      %p90 = scmp.ne.s32.totalorder %s85, %s87
      %p91 = scmp.eq.s32.totalorder %s16, 0
      %p92 = por %p90, %p91
      %p93 = scmp.ne.s32.totalorder %s85, %s87
      %p94 = scmp.eq.s32.totalorder %s21, 1
      %p95 = por %p93, %p94
      %p96 = scmp.ne.s32.totalorder %s87, %s88
      %p97 = scmp.eq.s32.totalorder %s21, 0
      %p98 = por %p96, %p97
      %p99 = scmp.ne.s32.totalorder %s87, %s88
      %p100 = scmp.eq.s32.totalorder %s22, 1
      %p101 = por %p99, %p100
      %p103 = scmp.ne.s32.totalorder %s88, %s102
      %p104 = scmp.eq.s32.totalorder %s22, 0
      %p105 = por %p103, %p104
      %s107 = sadd.s32 %s106, 1
      %p110 = scmp.eq.s32.totalorder %s16, 1
      %p111 = scmp.ne.s32.totalorder %s106, %s108
      %p112 = scmp.eq.s32.totalorder %s16, 0
      %p113 = por %p111, %p112
      %p114 = scmp.ne.s32.totalorder %s106, %s108
      %p115 = scmp.eq.s32.totalorder %s21, 1
      %p116 = por %p114, %p115
      %p117 = scmp.ne.s32.totalorder %s108, %s109
      %p118 = scmp.eq.s32.totalorder %s21, 0
      %p119 = por %p117, %p118
      %p120 = scmp.ne.s32.totalorder %s108, %s109
      %p121 = scmp.eq.s32.totalorder %s22, 1
      %p122 = por %p120, %p121
      %p124 = scmp.ne.s32.totalorder %s109, %s123
      %p125 = scmp.eq.s32.totalorder %s22, 0
      %p126 = por %p124, %p125
      %s127 = ssub.s32 %s23, %s35
      %p128 = scmp.eq.s32.totalorder %s127, 0
      %s130 = sadd.s32 %s129, 1
      %s131 = scalar_select %p128, %s129, %s130
      %p134 = pneg %p128
      %p135 = scmp.eq.s32.totalorder %s16, 1
      %p136 = por %p134, %p135
      %p137 = scmp.ne.s32.totalorder %s129, %s132
      %p138 = scmp.eq.s32.totalorder %s16, 0
      %p139 = por %p137, %p138
      %p140 = scmp.ne.s32.totalorder %s129, %s132
      %p141 = scmp.eq.s32.totalorder %s21, 1
      %p142 = por %p140, %p141
      %p143 = scmp.ne.s32.totalorder %s132, %s133
      %p144 = scmp.eq.s32.totalorder %s21, 0
      %p145 = por %p143, %p144
      %p146 = scmp.ne.s32.totalorder %s132, %s133
      %p147 = scmp.eq.s32.totalorder %s22, 1
      %p148 = por %p146, %p147
      %p150 = scmp.ne.s32.totalorder %s133, %s149
      %p151 = scmp.eq.s32.totalorder %s22, 0
      %p152 = por %p150, %p151
      %s154 = sadd.s32 %s153, 1
      %p157 = scmp.eq.s32.totalorder %s16, 1
      %p158 = scmp.ne.s32.totalorder %s153, %s155
      %p159 = scmp.eq.s32.totalorder %s16, 0
      %p160 = por %p158, %p159
      %p161 = scmp.ne.s32.totalorder %s153, %s155
      %p162 = scmp.eq.s32.totalorder %s21, 1
      %p163 = por %p161, %p162
      %p164 = scmp.ne.s32.totalorder %s155, %s156
      %p165 = scmp.eq.s32.totalorder %s21, 0
      %p166 = por %p164, %p165
      %p167 = scmp.ne.s32.totalorder %s155, %s156
      %p168 = scmp.eq.s32.totalorder %s22, 1
      %p169 = por %p167, %p168
      %p171 = scmp.ne.s32.totalorder %s156, %s170
      %p172 = scmp.eq.s32.totalorder %s22, 0
      %p173 = por %p171, %p172
      %s174 = ssub.s32 %s23, %s35
      %s175 = ssub.s32 %s24, %s31
      %s176 = sor.u32 %s174, %s175
      %p177 = scmp.eq.s32.totalorder %s176, 0
      %s179 = sadd.s32 %s178, 1
      %s180 = scalar_select %p177, %s178, %s179
      %p183 = pneg %p177
      %p184 = scmp.eq.s32.totalorder %s16, 1
      %p185 = por %p183, %p184
      %p186 = scmp.ne.s32.totalorder %s178, %s181
      %p187 = scmp.eq.s32.totalorder %s16, 0
      %p188 = por %p186, %p187
      %p189 = scmp.ne.s32.totalorder %s178, %s181
      %p190 = scmp.eq.s32.totalorder %s21, 1
      %p191 = por %p189, %p190
      %p192 = scmp.ne.s32.totalorder %s181, %s182
      %p193 = scmp.eq.s32.totalorder %s21, 0
      %p194 = por %p192, %p193
      %p195 = scmp.ne.s32.totalorder %s181, %s182
      %p196 = scmp.eq.s32.totalorder %s22, 1
      %p197 = por %p195, %p196
      %p199 = scmp.ne.s32.totalorder %s182, %s198
      %p200 = scmp.eq.s32.totalorder %s22, 0
      %p201 = por %p199, %p200
      %p202 = scmp.le.s32.totalorder 1, %s16
      %p203 = scmp.lt.s32.totalorder %s16, 3
      %p204 = pnand %p202, %p203
      %p205 = pneg %p204
      // Predicated region
      $region9: #{tpu_custom_call.1} parent=5 // pred_check
        _
      $region10: #{tpu_custom_call.1} parent=5 // pred_check_branch
        %207 = sbr.rel (%p204) target = $region12
      $region11: #{tpu_custom_call.1} parent=5 // pred_region
        %s208 = ssub.s32 %s16, 1
        // Predicated region
        $region13: #{tpu_custom_call.1} parent=11 // pred_check
          %p209 = pneg %p77
        $region14: #{tpu_custom_call.1} parent=11 // pred_check_branch
          %211 = sbr.rel (%p209) target = $region16
        $region15: #{tpu_custom_call.1} parent=11 // pred_region
          _
        $region16: #{tpu_custom_call.1} parent=11 // pred_fallthru
          _
        // Predicated region
        $region17: #{tpu_custom_call.1} parent=11 // pred_check
          %p212 = pneg %p98
        $region18: #{tpu_custom_call.1} parent=11 // pred_check_branch
          %214 = sbr.rel (%p212) target = $region20
        $region19: #{tpu_custom_call.1} parent=11 // pred_region
          _
        $region20: #{tpu_custom_call.1} parent=11 // pred_fallthru
          _
        // Predicated region
        $region21: #{tpu_custom_call.1} parent=11 // pred_check
          %p215 = pneg %p119
        $region22: #{tpu_custom_call.1} parent=11 // pred_check_branch
          %217 = sbr.rel (%p215) target = $region24
        $region23: #{tpu_custom_call.1} parent=11 // pred_region
          _
        $region24: #{tpu_custom_call.1} parent=11 // pred_fallthru
          _
        // Predicated region
        $region25: #{tpu_custom_call.1} parent=11 // pred_check
          %p218 = pneg %p166
        $region26: #{tpu_custom_call.1} parent=11 // pred_check_branch
          %220 = sbr.rel (%p218) target = $region28
        $region27: #{tpu_custom_call.1} parent=11 // pred_region
          _
        $region28: #{tpu_custom_call.1} parent=11 // pred_fallthru
          _
      $region12: #{tpu_custom_call.1} parent=5 // pred_fallthru
        _
      %p221 = scmp.lt.s32.totalorder %s16, 2
      // Predicated region
      $region29: #{tpu_custom_call.1} parent=5 // pred_check
        %p222 = pneg %p221
      $region30: #{tpu_custom_call.1} parent=5 // pred_check_branch
        %224 = sbr.rel (%p222) target = $region32
      $region31: #{tpu_custom_call.1} parent=5 // pred_region
        // Predicated region
        $region33: #{tpu_custom_call.1} parent=31 // pred_check
          %p225 = pneg %p50
        $region34: #{tpu_custom_call.1} parent=31 // pred_check_branch
          %227 = sbr.rel (%p225) target = $region36
        $region35: #{tpu_custom_call.1} parent=31 // pred_region
          %p228 = scmp.lt.s32.totalorder %s23, 1
          %s229 = scalar_select %p228, %s23, 1
          %p230 = scmp.lt.s32.totalorder %s24, 0
          %s231 = scalar_select %p230, %s24, 0
          %s232 = sadd.s32 %s231, %s229
          %s233 = smul.addr %s232, 8
          %s234 = scalar_lea.vmem %s0, %s233
        $region36: #{tpu_custom_call.1} parent=31 // pred_fallthru
          _
        // Predicated region
        $region37: #{tpu_custom_call.1} parent=31 // pred_check
          %p235 = pneg %p139
        $region38: #{tpu_custom_call.1} parent=31 // pred_check_branch
          %237 = sbr.rel (%p235) target = $region40
        $region39: #{tpu_custom_call.1} parent=31 // pred_region
          %p238 = scmp.lt.s32.totalorder %s23, 1
          %s239 = scalar_select %p238, %s23, 1
          %s240 = scalar_lea.vmem %s4, %s239
        $region40: #{tpu_custom_call.1} parent=31 // pred_fallthru
          _
      $region32: #{tpu_custom_call.1} parent=5 // pred_fallthru
        _
      %p241 = scmp.le.s32.totalorder 1, %s16
      %p242 = scmp.lt.s32.totalorder %s16, 3
      %p243 = pnand %p241, %p242
      %p244 = pneg %p243
      // Predicated region
      $region41: #{tpu_custom_call.1} parent=5 // pred_check
        _
      $region42: #{tpu_custom_call.1} parent=5 // pred_check_branch
        %246 = sbr.rel (%p243) target = $region44
      $region43: #{tpu_custom_call.1} parent=5 // pred_region
        %s247 = ssub.s32 %s16, 1
        %p248 = scmp.lt.s32.totalorder %s25, 1
        %s249 = scalar_select %p248, %s25, 1
        %p250 = scmp.lt.s32.totalorder %s26, 0
        %s251 = scalar_select %p250, %s26, 0
        %s252 = sadd.s32 %s251, %s249
        %s253 = smul.addr %s252, 8
        %s254 = scalar_lea.vmem %s0, %s253
        %p255 = pneg %p56
        %p256 = pneg %p53
        %p257 = pneg %p77
        %p258 = pneg %p74
        %p259 = pneg %p98
        %p260 = pneg %p95
        %p261 = pneg %p119
        %p262 = pneg %p116
        %p263 = scmp.lt.s32.totalorder %s25, 1
        %s264 = scalar_select %p263, %s25, 1
        %s265 = scalar_lea.vmem %s4, %s264
        %p266 = pneg %p145
        %p267 = pneg %p142
        %p268 = pneg %p166
        %p269 = pneg %p163
        %p270 = pneg %p194
        %p271 = pneg %p191
        %s272 = sand.u32 %s181, 1
        %s273 = scalar_lea.sflag [#allocation4], %s272
        %s274 = sand.u32 %s181, 1
        %s275 = smul.addr %s274, 8
        %s276 = scalar_lea.vmem [#allocation3], %s275
        %p277 = scmp.lt.s32.totalorder %s25, 1
        %s278 = scalar_select %p277, %s25, 1
        %p279 = scmp.lt.s32.totalorder %s26, 0
        %s280 = scalar_select %p279, %s26, 0
        %s281 = sadd.s32 %s280, %s278
        %s282 = smul.addr %s281, 8
        %s283 = scalar_lea.vmem %s0, %s282
        %p284 = scmp.lt.s32.totalorder %s25, 1
        %s285 = scalar_select %p284, %s25, 1
        %s286 = scalar_lea.vmem %s4, %s285
        %v287 = vld [vmem:[%s283] sm:$0xff]
        %v288 = vld [vmem:[%s1] sm:$0xff]
        %v289 = vld [vmem:[%s1 + $0x8] sm:$0xff]
        %v290 = vld [vmem:[%s1 + $0x10] sm:$0xff]
        %v291 = vld [vmem:[%s1 + $0x18] sm:$0xff]
        %v292 = vld [vmem:[%s2] sm:$0x1]
        %v294 = vlaneseq
        %v295 = vshrl.u32 %v294, 7
        %v296 = vsub.s32 0, %v295
        %v297 = vrot.slane %v292, %v296
        %vm299 = vcmask 261120
        %v301 = vsel %vm299, %v287, 0
        %303 = vmatprep.subr.mxu0 0.0
        %304 = vmatpush1.msra.mxu0 0.0
        %305 = vmatprep.subr.mxu0 0.0
        %306 = vmatpush1.msra.mxu0 0.0
        %307 = vmatprep.subr.mxu0 0.0
        %308 = vmatpush1.msra.mxu0 0.0
        %309 = vmatprep.subr.mxu0 0.0
        %310 = vmatpush1.msra.mxu0 0.0
        %311 = vmatprep.subr.mxu0 0.0
        %312 = vmatpush1.msra.mxu0 0.0
        %313 = vmatprep.subr.mxu0 0.0
        %314 = vmatpush1.msra.mxu0 0.0
        %315 = vmatprep.subr.mxu0 0.0
        %316 = vmatpush1.msra.mxu0 0.0
        %317 = vmatprep.subr.mxu0 0.0
        %318 = vmatpush1.msra.mxu0 0.0
        %319 = vmatprep.subr.mxu0 0.0
        %320 = vmatpush1.msra.mxu0 0.0
        %321 = vmatprep.subr.mxu0 0.0
        %322 = vmatpush1.msra.mxu0 0.0
        %323 = vmatprep.subr.mxu0 0.0
        %324 = vmatpush1.msra.mxu0 0.0
        %325 = vmatprep.subr.mxu0 0.0
        %326 = vmatpush1.msra.mxu0 0.0
        %327 = vmatprep.subr.mxu0 0.0
        %328 = vmatpush1.msra.mxu0 %v291
        %329 = vmatprep.subr.mxu0 0.0
        %330 = vmatpush1.msra.mxu0 %v290
        %331 = vmatprep.subr.mxu0 0.0
        %332 = vmatpush1.msra.mxu0 %v289
        %333 = vmatprep.subr.mxu0 0.0
        %334 = vmatpush1.msra.mxu0 %v288
        %335 = vmatprep.subr.mxu0 0.0
        %336 = vmatpush2.msra.mxu0 0.0
        %337 = vmatprep.subr.mxu0 0.0
        %338 = vmatpush2.msra.mxu0 0.0
        %339 = vmatprep.subr.mxu0 0.0
        %340 = vmatpush2.msra.mxu0 0.0
        %341 = vmatprep.subr.mxu0 0.0
        %342 = vmatpush2.msra.mxu0 0.0
        %343 = vmatprep.subr.mxu0 0.0
        %344 = vmatpush2.msra.mxu0 0.0
        %345 = vmatprep.subr.mxu0 0.0
        %346 = vmatpush2.msra.mxu0 0.0
        %347 = vmatprep.subr.mxu0 0.0
        %348 = vmatpush2.msra.mxu0 0.0
        %349 = vmatprep.subr.mxu0 0.0
        %350 = vmatpush2.msra.mxu0 0.0
        %351 = vmatprep.subr.mxu0 0.0
        %352 = vmatpush2.msra.mxu0 0.0
        %353 = vmatprep.subr.mxu0 0.0
        %354 = vmatpush2.msra.mxu0 0.0
        %355 = vmatprep.subr.mxu0 0.0
        %356 = vmatpush2.msra.mxu0 0.0
        %357 = vmatprep.subr.mxu0 0.0
        %358 = vmatpush2.msra.mxu0 0.0
        %359 = vmatprep.subr.mxu0 0.0
        %360 = vmatpush2.msra.mxu0 0.0
        %361 = vmatprep.subr.mxu0 0.0
        %362 = vmatpush2.msra.mxu0 0.0
        %363 = vmatprep.subr.mxu0 0.0
        %364 = vmatpush2.msra.mxu0 0.0
        %365 = vmatprep.subr.mxu0 0.0
        %366 = vmatpush2.msra.mxu0 0.0
        %367 = vmatprep.mubr.f32.mxu0 0.0
        %368 = vmatmul.mubr.f32.gmra.mxu0 %v301
        %v369 = vpop.f32.mrf.mxu0
        %v370 = vadd.f32 %v297, %v369
        %v371 = vpop.f32.mrf.mxu0
        %372 = vdwg.mxu0
        %v373 = vmul.f32 %v370, 0.5
        %v374 = vmul.f32 %v370, 0.70710677
        %v375 = verf.f32.pop %v374
        %v376 = vadd.f32 %v375, 1.0
        %v377 = vmul.f32 %v373, %v376
        %v378 = vld [vmem:[%s3] sm:$0xff]
        %v379 = vld [vmem:[%s3 + $0x8] sm:$0xff]
        %v380 = vld [vmem:[%s3 + $0x10] sm:$0xff]
        %v381 = vld [vmem:[%s3 + $0x18] sm:$0xff]
        %v382 = vld [vmem:[%s3 + $0x20] sm:$0xff]
        %v383 = vld [vmem:[%s3 + $0x28] sm:$0xff]
        %v384 = vld [vmem:[%s3 + $0x30] sm:$0xff]
        %v385 = vld [vmem:[%s3 + $0x38] sm:$0xff]
        %v386 = vld [vmem:[%s3 + $0x40] sm:$0xff]
        %v387 = vld [vmem:[%s3 + $0x48] sm:$0xff]
        %v388 = vld [vmem:[%s3 + $0x50] sm:$0xff]
        %v389 = vld [vmem:[%s3 + $0x58] sm:$0xff]
        %v390 = vld [vmem:[%s3 + $0x60] sm:$0xff]
        %v391 = vld [vmem:[%s3 + $0x68] sm:$0xff]
        %v392 = vld [vmem:[%s3 + $0x70] sm:$0xff]
        %v393 = vld [vmem:[%s3 + $0x78] sm:$0xff]
        %v394 = vld [vmem:[%s286] sm:$0x1]
        %v396 = vlaneseq
        %v397 = vshrl.u32 %v396, 7
        %v398 = vsub.s32 0, %v397
        %v399 = vrot.slane %v394, %v398
        %401 = vmatprep.subr.mxu0 0.0
        %402 = vmatpush1.msra.mxu0 %v393
        %403 = vmatprep.subr.mxu0 0.0
        %404 = vmatpush1.msra.mxu0 %v392
        %405 = vmatprep.subr.mxu0 0.0
        %406 = vmatpush1.msra.mxu0 %v391
        %407 = vmatprep.subr.mxu0 0.0
        %408 = vmatpush1.msra.mxu0 %v390
        %409 = vmatprep.subr.mxu0 0.0
        %410 = vmatpush1.msra.mxu0 %v389
        %411 = vmatprep.subr.mxu0 0.0
        %412 = vmatpush1.msra.mxu0 %v388
        %413 = vmatprep.subr.mxu0 0.0
        %414 = vmatpush1.msra.mxu0 %v387
        %415 = vmatprep.subr.mxu0 0.0
        %416 = vmatpush1.msra.mxu0 %v386
        %417 = vmatprep.subr.mxu0 0.0
        %418 = vmatpush1.msra.mxu0 %v385
        %419 = vmatprep.subr.mxu0 0.0
        %420 = vmatpush1.msra.mxu0 %v384
        %421 = vmatprep.subr.mxu0 0.0
        %422 = vmatpush1.msra.mxu0 %v383
        %423 = vmatprep.subr.mxu0 0.0
        %424 = vmatpush1.msra.mxu0 %v382
        %425 = vmatprep.subr.mxu0 0.0
        %426 = vmatpush1.msra.mxu0 %v381
        %427 = vmatprep.subr.mxu0 0.0
        %428 = vmatpush1.msra.mxu0 %v380
        %429 = vmatprep.subr.mxu0 0.0
        %430 = vmatpush1.msra.mxu0 %v379
        %431 = vmatprep.subr.mxu0 0.0
        %432 = vmatpush1.msra.mxu0 %v378
        %433 = vmatprep.subr.mxu0 0.0
        %434 = vmatpush2.msra.mxu0 0.0
        %435 = vmatprep.subr.mxu0 0.0
        %436 = vmatpush2.msra.mxu0 0.0
        %437 = vmatprep.subr.mxu0 0.0
        %438 = vmatpush2.msra.mxu0 0.0
        %439 = vmatprep.subr.mxu0 0.0
        %440 = vmatpush2.msra.mxu0 0.0
        %441 = vmatprep.subr.mxu0 0.0
        %442 = vmatpush2.msra.mxu0 0.0
        %443 = vmatprep.subr.mxu0 0.0
        %444 = vmatpush2.msra.mxu0 0.0
        %445 = vmatprep.subr.mxu0 0.0
        %446 = vmatpush2.msra.mxu0 0.0
        %447 = vmatprep.subr.mxu0 0.0
        %448 = vmatpush2.msra.mxu0 0.0
        %449 = vmatprep.subr.mxu0 0.0
        %450 = vmatpush2.msra.mxu0 0.0
        %451 = vmatprep.subr.mxu0 0.0
        %452 = vmatpush2.msra.mxu0 0.0
        %453 = vmatprep.subr.mxu0 0.0
        %454 = vmatpush2.msra.mxu0 0.0
        %455 = vmatprep.subr.mxu0 0.0
        %456 = vmatpush2.msra.mxu0 0.0
        %457 = vmatprep.subr.mxu0 0.0
        %458 = vmatpush2.msra.mxu0 0.0
        %459 = vmatprep.subr.mxu0 0.0
        %460 = vmatpush2.msra.mxu0 0.0
        %461 = vmatprep.subr.mxu0 0.0
        %462 = vmatpush2.msra.mxu0 0.0
        %463 = vmatprep.subr.mxu0 0.0
        %464 = vmatpush2.msra.mxu0 0.0
        %465 = vmatprep.mubr.f32.mxu0 0.0
        %466 = vmatmul.mubr.f32.gmra.mxu0 %v377
        %v467 = vpop.f32.mrf.mxu0
        %v468 = vadd.f32 %v399, %v467
        %v469 = vpop.f32.mrf.mxu0
        %470 = vdwg.mxu0
        %s471 = sld [smem:[#allocation2]]
        %v472 = vstv %s471
        %v473 = vmul.f32 %v472, %v468
        %v474 = vadd.f32 %v287, %v473
        %475 = vst.msk [vmem:[%s276] sm:$0xff] %vm299, %v474
        %s476 = sand.u32 %s181, 1
        %s477 = scalar_lea.sflag [#allocation4], %s476
        %s478 = sand.u32 %s181, 1
        %s479 = smul.addr %s478, 8
        %s480 = scalar_lea.vmem [#allocation3], %s479
        // Predicated region
        $region45: #{tpu_custom_call.1} parent=43 // pred_check
          %p481 = pneg %p191
        $region46: #{tpu_custom_call.1} parent=43 // pred_check_branch
          %483 = sbr.rel (%p481) target = $region48
        $region47: #{tpu_custom_call.1} parent=43 // pred_region
          %s485 = ssub.s32 128, 128
          %486 = vsyncadd %s477, %s485
          %s487 = sadd.s32 %s26, %s25
          %s488 = smul.addr %s487, 128
          %s489 = scalar_lea.hbm %s6, %s488
          %s491 = sshll.u32 %s480, 4
          %s492 = int_to_ptr.vmem [resolvable:$true] %s491
          %494 = dma.vmem_to_hbm [thread:$0]  %s492, 128, %s489, %s477
        $region48: #{tpu_custom_call.1} parent=43 // pred_fallthru
          _
      $region44: #{tpu_custom_call.1} parent=5 // pred_fallthru
        _
      %p495 = scmp.le.s32.totalorder 2, %s16
      // Predicated region
      $region49: #{tpu_custom_call.1} parent=5 // pred_check
        %p496 = pneg %p495
      $region50: #{tpu_custom_call.1} parent=5 // pred_check_branch
        %498 = sbr.rel (%p496) target = $region52
      $region51: #{tpu_custom_call.1} parent=5 // pred_region
        %s499 = ssub.s32 %s16, 2
        // Predicated region
        $region53: #{tpu_custom_call.1} parent=51 // pred_check
          %p500 = pneg %p197
        $region54: #{tpu_custom_call.1} parent=51 // pred_check_branch
          %502 = sbr.rel (%p500) target = $region56
        $region55: #{tpu_custom_call.1} parent=51 // pred_region
          %s503 = sand.u32 %s182, 1
          %s504 = scalar_lea.sflag [#allocation4], %s503
          %s505 = sand.u32 %s182, 1
          %s506 = smul.addr %s505, 8
          %s507 = scalar_lea.vmem [#allocation3], %s506
          %508 = dma.done %s504, 128
        $region56: #{tpu_custom_call.1} parent=51 // pred_fallthru
          _
      $region52: #{tpu_custom_call.1} parent=5 // pred_fallthru
        _
    $region6: #{tpu_custom_call.1} parent=1 // loop_footer
      %s20 = sadd.s32 1, %s16
    $region7: #{tpu_custom_call.1} parent=1 // loop_footer_branch
      %15 = sbr.rel target = $region3
    $region8: #{tpu_custom_call.1} parent=1 // loop_exit
      _
    %509 = vsyncpa [#allocation4], 1
    %s510 = scalar_lea.sflag [#allocation4], 1
    %511 = vsyncpa %s510, 1

</llo_original>
